<compile_context>
chip_gen: v7x
topology: tpu7x:2x2x1
jax: 0.10.0
libtpu: 0.0.40
codegen_flags: <defaults>
</compile_context>

<pallas_src>
import jax
import jax.numpy as jnp
from jax.experimental import pallas as pl
from jax.experimental.pallas import tpu as pltpu


# ---------------------------------------------------------------------------
# Packed-parameter layout (flat f32[32], indices):
#   w1[k, j]  -> k*2 + j        (k in 0..8, j in 0..1)   indices  0..17
#   b1[j]     -> 18 + j                                   indices 18..19
#   wr[0..1]  -> 20, 21    br -> 22
#   wg[0..1]  -> 23, 24    bg -> 25
#   wb[0..1]  -> 26, 27    c  -> 28        (29..31 padding)
# ---------------------------------------------------------------------------
_PACKED_LEN = 32


def _pack_params(p):
    flat = jnp.concatenate([
        p["w1"].reshape(-1),   # (18,) row-major (in, out)
        p["b1"].reshape(-1),   # (2,)
        p["wr"].reshape(-1),   # (2,)
        p["br"].reshape(-1),   # (1,)
        p["wg"].reshape(-1),   # (2,)
        p["bg"].reshape(-1),   # (1,)
        p["wb"].reshape(-1),   # (2,)
        p["c"].reshape(-1),    # (1,)
    ]).astype(jnp.float32)
    return jnp.pad(flat, (0, _PACKED_LEN - flat.shape[0]))


def _titanic_tqnet_kernel(p_ref, x_ref, o_ref):
    """p_ref: SMEM f32[32] packed params; x_ref: (9, TILE_B); o_ref: (1, TILE_B)."""
    x = x_ref[...]  # (9, TILE_B) float32

    # Hoist the 9 feature rows once; reuse for both fc1 output columns.
    rows = [x[k:k + 1, :] for k in range(9)]

    # fc1: two unrolled dot products against SMEM scalar weights (VPU FMAs),
    # bias folded as scalar add; tanh routes to the EUP slot.
    acc0 = rows[0] * p_ref[0]
    acc1 = rows[0] * p_ref[1]
    for k in range(1, 9):
        acc0 = acc0 + rows[k] * p_ref[2 * k]
        acc1 = acc1 + rows[k] * p_ref[2 * k + 1]
    h0 = jnp.tanh(acc0 + p_ref[18])   # (1, TILE_B)
    h1 = jnp.tanh(acc1 + p_ref[19])   # (1, TILE_B)

    # Quasi(2, 1): quadratic neuron, fully unrolled on the VPU.
    r = h0 * p_ref[20] + h1 * p_ref[21] + p_ref[22]
    g = h0 * p_ref[23] + h1 * p_ref[24] + p_ref[25]
    q = (h0 * h0) * p_ref[26] + (h1 * h1) * p_ref[27] + p_ref[28]

    o_ref[...] = (r * g + q).astype(o_ref.dtype)


def _round_up(n, m):
    return ((n + m - 1) // m) * m


def titanic_tqnet_forward(x, params, *, tile_b=8192):
    """x: (B, 9) float32 -> (B, 1) float32."""
    B, F = x.shape
    assert F == 9, f"expected 9 input features, got {F}"
    assert tile_b % 128 == 0, "tile_b must be a multiple of 128"

    # Lane-dense batch tiling: balance the (128-padded) batch over the fewest
    # grid steps so per-step overhead and padding waste are both minimized.
    bp0 = _round_up(B, 128)
    nb = pl.cdiv(bp0, tile_b)
    tb = _round_up(pl.cdiv(bp0, nb), 128)
    bp = nb * tb

    # Batch-on-lanes layout: (9, B) padded to (9, bp). Padding is zeros; the
    # corresponding output lanes are computed but sliced away below.
    xt = jnp.pad(x.astype(jnp.float32).T, ((0, 0), (0, bp - B)))
    packed = _pack_params(params)

    out_t = pl.pallas_call(
        _titanic_tqnet_kernel,
        out_shape=jax.ShapeDtypeStruct((1, bp), jnp.float32),
        grid=(nb,),
        in_specs=[
            pl.BlockSpec(memory_space=pltpu.MemorySpace.SMEM),   # packed params
            pl.BlockSpec((9, tb), lambda i: (0, i)),             # x tile (9, tb)
        ],
        out_specs=pl.BlockSpec((1, tb), lambda i: (0, i)),       # lane-dense output
        compiler_params=pltpu.CompilerParams(
            dimension_semantics=("parallel",),                   # v7x: shard over 2 TCs
        ),
    )(packed, xt)

    return out_t[0, :B].reshape(B, 1)


def init_params(key):
    """Deterministic PyTorch-style init: U(-1/sqrt(fan_in), 1/sqrt(fan_in)).

    Weights stored transposed, (in_features, out_features), so x @ W + b matches
    PyTorch's x @ W.T + b. When importing real PyTorch weights, transpose them.
    """
    ks = jax.random.split(key, 9)

    def u(k, shape, fan_in):
        bound = 1.0 / jnp.sqrt(float(fan_in))
        return jax.random.uniform(k, shape, jnp.float32, -bound, bound)

    return {
        # fc1: Linear(9, 2) stored as (in, out) = (9, 2), bias (1, 2)
        "w1": u(ks[0], (9, 2), 9),
        "b1": u(ks[1], (1, 2), 9),
        # Quasi(2, 1): three weight sets (in, out) = (2, 1), biases (1, 1)
        "wr": u(ks[2], (2, 1), 2),
        "br": u(ks[3], (1, 1), 2),
        "wg": u(ks[4], (2, 1), 2),
        "bg": u(ks[5], (1, 1), 2),
        "wb": u(ks[6], (2, 1), 2),
        "c":  u(ks[7], (1, 1), 2),
    }


def reference_forward(x, p):
    """Pure-JAX reference for sanity checking."""
    h = jnp.tanh(x @ p["w1"] + p["b1"])
    r = h @ p["wr"] + p["br"]
    g = h @ p["wg"] + p["bg"]
    q = (h * h) @ p["wb"] + p["c"]
    return r * g + q


if __name__ == "__main__":
    key = jax.random.PRNGKey(0)
    k_param, k_x = jax.random.split(key)

    params = init_params(k_param)
    # Titanic-style input: batch of 8 samples, 9 features each.
    x = jax.random.normal(k_x, (8, 9), dtype=jnp.float32)

    out = titanic_tqnet_forward(x, params)
    out = jax.block_until_ready(out)

    ref = reference_forward(x, params)
    assert out.shape == (8, 1), out.shape
    assert jnp.allclose(out, ref, atol=1e-5, rtol=1e-5), "mismatch vs reference"

    print("KERNEL_OK")
</pallas_src>

<mosaic_0001>
module attributes {stable_mosaic.version = 11 : i64} {
  func.func @_titanic_tqnet_kernel(%arg0: i32, %arg1: memref<32xf32, #tpu.memory_space<smem>>, %arg2: memref<9x128xf32, #tpu.memory_space<vmem>>, %arg3: memref<1x128xf32, #tpu.memory_space<vmem>>) attributes {dimension_semantics = [#tpu.dimension_semantics<parallel>], iteration_bounds = array<i64: 1>, scalar_prefetch = 0 : i64, scratch_operands = 0 : i64, tpu.core_type = #tpu.core_type<tc>, window_params = [{transform_indices = @transform_0, window_bounds = array<i64: 32>}, {transform_indices = @transform_1, window_bounds = array<i64: 9, 128>}, {transform_indices = @transform_2, window_bounds = array<i64: 1, 128>}]} {
    %c0 = arith.constant 0 : index
    %c0_0 = arith.constant 0 : index
    %0 = vector.load %arg2[%c0, %c0_0] : memref<9x128xf32, #tpu.memory_space<vmem>>, vector<9x128xf32>
    %1 = vector.extract_strided_slice %0 {offsets = [0, 0], sizes = [1, 128], strides = [1, 1]} : vector<9x128xf32> to vector<1x128xf32>
    %2 = vector.extract_strided_slice %0 {offsets = [1, 0], sizes = [1, 128], strides = [1, 1]} : vector<9x128xf32> to vector<1x128xf32>
    %3 = vector.extract_strided_slice %0 {offsets = [2, 0], sizes = [1, 128], strides = [1, 1]} : vector<9x128xf32> to vector<1x128xf32>
    %4 = vector.extract_strided_slice %0 {offsets = [3, 0], sizes = [1, 128], strides = [1, 1]} : vector<9x128xf32> to vector<1x128xf32>
    %5 = vector.extract_strided_slice %0 {offsets = [4, 0], sizes = [1, 128], strides = [1, 1]} : vector<9x128xf32> to vector<1x128xf32>
    %6 = vector.extract_strided_slice %0 {offsets = [5, 0], sizes = [1, 128], strides = [1, 1]} : vector<9x128xf32> to vector<1x128xf32>
    %7 = vector.extract_strided_slice %0 {offsets = [6, 0], sizes = [1, 128], strides = [1, 1]} : vector<9x128xf32> to vector<1x128xf32>
    %8 = vector.extract_strided_slice %0 {offsets = [7, 0], sizes = [1, 128], strides = [1, 1]} : vector<9x128xf32> to vector<1x128xf32>
    %9 = vector.extract_strided_slice %0 {offsets = [8, 0], sizes = [1, 128], strides = [1, 1]} : vector<9x128xf32> to vector<1x128xf32>
    %c0_1 = arith.constant 0 : index
    %10 = memref.load %arg1[%c0_1] : memref<32xf32, #tpu.memory_space<smem>>
    %11 = vector.broadcast %10 : f32 to vector<1x128xf32>
    %12 = arith.mulf %1, %11 : vector<1x128xf32>
    %c1 = arith.constant 1 : index
    %13 = memref.load %arg1[%c1] : memref<32xf32, #tpu.memory_space<smem>>
    %14 = vector.broadcast %13 : f32 to vector<1x128xf32>
    %15 = arith.mulf %1, %14 : vector<1x128xf32>
    %c2 = arith.constant 2 : index
    %16 = memref.load %arg1[%c2] : memref<32xf32, #tpu.memory_space<smem>>
    %17 = vector.broadcast %16 : f32 to vector<1x128xf32>
    %18 = arith.mulf %2, %17 : vector<1x128xf32>
    %19 = arith.addf %12, %18 : vector<1x128xf32>
    %c3 = arith.constant 3 : index
    %20 = memref.load %arg1[%c3] : memref<32xf32, #tpu.memory_space<smem>>
    %21 = vector.broadcast %20 : f32 to vector<1x128xf32>
    %22 = arith.mulf %2, %21 : vector<1x128xf32>
    %23 = arith.addf %15, %22 : vector<1x128xf32>
    %c4 = arith.constant 4 : index
    %24 = memref.load %arg1[%c4] : memref<32xf32, #tpu.memory_space<smem>>
    %25 = vector.broadcast %24 : f32 to vector<1x128xf32>
    %26 = arith.mulf %3, %25 : vector<1x128xf32>
    %27 = arith.addf %19, %26 : vector<1x128xf32>
    %c5 = arith.constant 5 : index
    %28 = memref.load %arg1[%c5] : memref<32xf32, #tpu.memory_space<smem>>
    %29 = vector.broadcast %28 : f32 to vector<1x128xf32>
    %30 = arith.mulf %3, %29 : vector<1x128xf32>
    %31 = arith.addf %23, %30 : vector<1x128xf32>
    %c6 = arith.constant 6 : index
    %32 = memref.load %arg1[%c6] : memref<32xf32, #tpu.memory_space<smem>>
    %33 = vector.broadcast %32 : f32 to vector<1x128xf32>
    %34 = arith.mulf %4, %33 : vector<1x128xf32>
    %35 = arith.addf %27, %34 : vector<1x128xf32>
    %c7 = arith.constant 7 : index
    %36 = memref.load %arg1[%c7] : memref<32xf32, #tpu.memory_space<smem>>
    %37 = vector.broadcast %36 : f32 to vector<1x128xf32>
    %38 = arith.mulf %4, %37 : vector<1x128xf32>
    %39 = arith.addf %31, %38 : vector<1x128xf32>
    %c8 = arith.constant 8 : index
    %40 = memref.load %arg1[%c8] : memref<32xf32, #tpu.memory_space<smem>>
    %41 = vector.broadcast %40 : f32 to vector<1x128xf32>
    %42 = arith.mulf %5, %41 : vector<1x128xf32>
    %43 = arith.addf %35, %42 : vector<1x128xf32>
    %c9 = arith.constant 9 : index
    %44 = memref.load %arg1[%c9] : memref<32xf32, #tpu.memory_space<smem>>
    %45 = vector.broadcast %44 : f32 to vector<1x128xf32>
    %46 = arith.mulf %5, %45 : vector<1x128xf32>
    %47 = arith.addf %39, %46 : vector<1x128xf32>
    %c10 = arith.constant 10 : index
    %48 = memref.load %arg1[%c10] : memref<32xf32, #tpu.memory_space<smem>>
    %49 = vector.broadcast %48 : f32 to vector<1x128xf32>
    %50 = arith.mulf %6, %49 : vector<1x128xf32>
    %51 = arith.addf %43, %50 : vector<1x128xf32>
    %c11 = arith.constant 11 : index
    %52 = memref.load %arg1[%c11] : memref<32xf32, #tpu.memory_space<smem>>
    %53 = vector.broadcast %52 : f32 to vector<1x128xf32>
    %54 = arith.mulf %6, %53 : vector<1x128xf32>
    %55 = arith.addf %47, %54 : vector<1x128xf32>
    %c12 = arith.constant 12 : index
    %56 = memref.load %arg1[%c12] : memref<32xf32, #tpu.memory_space<smem>>
    %57 = vector.broadcast %56 : f32 to vector<1x128xf32>
    %58 = arith.mulf %7, %57 : vector<1x128xf32>
    %59 = arith.addf %51, %58 : vector<1x128xf32>
    %c13 = arith.constant 13 : index
    %60 = memref.load %arg1[%c13] : memref<32xf32, #tpu.memory_space<smem>>
    %61 = vector.broadcast %60 : f32 to vector<1x128xf32>
    %62 = arith.mulf %7, %61 : vector<1x128xf32>
    %63 = arith.addf %55, %62 : vector<1x128xf32>
    %c14 = arith.constant 14 : index
    %64 = memref.load %arg1[%c14] : memref<32xf32, #tpu.memory_space<smem>>
    %65 = vector.broadcast %64 : f32 to vector<1x128xf32>
    %66 = arith.mulf %8, %65 : vector<1x128xf32>
    %67 = arith.addf %59, %66 : vector<1x128xf32>
    %c15 = arith.constant 15 : index
    %68 = memref.load %arg1[%c15] : memref<32xf32, #tpu.memory_space<smem>>
    %69 = vector.broadcast %68 : f32 to vector<1x128xf32>
    %70 = arith.mulf %8, %69 : vector<1x128xf32>
    %71 = arith.addf %63, %70 : vector<1x128xf32>
    %c16 = arith.constant 16 : index
    %72 = memref.load %arg1[%c16] : memref<32xf32, #tpu.memory_space<smem>>
    %73 = vector.broadcast %72 : f32 to vector<1x128xf32>
    %74 = arith.mulf %9, %73 : vector<1x128xf32>
    %75 = arith.addf %67, %74 : vector<1x128xf32>
    %c17 = arith.constant 17 : index
    %76 = memref.load %arg1[%c17] : memref<32xf32, #tpu.memory_space<smem>>
    %77 = vector.broadcast %76 : f32 to vector<1x128xf32>
    %78 = arith.mulf %9, %77 : vector<1x128xf32>
    %79 = arith.addf %71, %78 : vector<1x128xf32>
    %c18 = arith.constant 18 : index
    %80 = memref.load %arg1[%c18] : memref<32xf32, #tpu.memory_space<smem>>
    %81 = vector.broadcast %80 : f32 to vector<1x128xf32>
    %82 = arith.addf %75, %81 : vector<1x128xf32>
    %83 = math.tanh %82 : vector<1x128xf32>
    %c19 = arith.constant 19 : index
    %84 = memref.load %arg1[%c19] : memref<32xf32, #tpu.memory_space<smem>>
    %85 = vector.broadcast %84 : f32 to vector<1x128xf32>
    %86 = arith.addf %79, %85 : vector<1x128xf32>
    %87 = math.tanh %86 : vector<1x128xf32>
    %c20 = arith.constant 20 : index
    %88 = memref.load %arg1[%c20] : memref<32xf32, #tpu.memory_space<smem>>
    %89 = vector.broadcast %88 : f32 to vector<1x128xf32>
    %90 = arith.mulf %83, %89 : vector<1x128xf32>
    %c21 = arith.constant 21 : index
    %91 = memref.load %arg1[%c21] : memref<32xf32, #tpu.memory_space<smem>>
    %92 = vector.broadcast %91 : f32 to vector<1x128xf32>
    %93 = arith.mulf %87, %92 : vector<1x128xf32>
    %94 = arith.addf %90, %93 : vector<1x128xf32>
    %c22 = arith.constant 22 : index
    %95 = memref.load %arg1[%c22] : memref<32xf32, #tpu.memory_space<smem>>
    %96 = vector.broadcast %95 : f32 to vector<1x128xf32>
    %97 = arith.addf %94, %96 : vector<1x128xf32>
    %c23 = arith.constant 23 : index
    %98 = memref.load %arg1[%c23] : memref<32xf32, #tpu.memory_space<smem>>
    %99 = vector.broadcast %98 : f32 to vector<1x128xf32>
    %100 = arith.mulf %83, %99 : vector<1x128xf32>
    %c24 = arith.constant 24 : index
    %101 = memref.load %arg1[%c24] : memref<32xf32, #tpu.memory_space<smem>>
    %102 = vector.broadcast %101 : f32 to vector<1x128xf32>
    %103 = arith.mulf %87, %102 : vector<1x128xf32>
    %104 = arith.addf %100, %103 : vector<1x128xf32>
    %c25 = arith.constant 25 : index
    %105 = memref.load %arg1[%c25] : memref<32xf32, #tpu.memory_space<smem>>
    %106 = vector.broadcast %105 : f32 to vector<1x128xf32>
    %107 = arith.addf %104, %106 : vector<1x128xf32>
    %108 = arith.mulf %83, %83 : vector<1x128xf32>
    %c26 = arith.constant 26 : index
    %109 = memref.load %arg1[%c26] : memref<32xf32, #tpu.memory_space<smem>>
    %110 = vector.broadcast %109 : f32 to vector<1x128xf32>
    %111 = arith.mulf %108, %110 : vector<1x128xf32>
    %112 = arith.mulf %87, %87 : vector<1x128xf32>
    %c27 = arith.constant 27 : index
    %113 = memref.load %arg1[%c27] : memref<32xf32, #tpu.memory_space<smem>>
    %114 = vector.broadcast %113 : f32 to vector<1x128xf32>
    %115 = arith.mulf %112, %114 : vector<1x128xf32>
    %116 = arith.addf %111, %115 : vector<1x128xf32>
    %c28 = arith.constant 28 : index
    %117 = memref.load %arg1[%c28] : memref<32xf32, #tpu.memory_space<smem>>
    %118 = vector.broadcast %117 : f32 to vector<1x128xf32>
    %119 = arith.addf %116, %118 : vector<1x128xf32>
    %120 = arith.mulf %97, %107 : vector<1x128xf32>
    %121 = arith.addf %120, %119 : vector<1x128xf32>
    %c0_2 = arith.constant 0 : index
    %c0_3 = arith.constant 0 : index
    %122 = vector.load %arg3[%c0_2, %c0_3] : memref<1x128xf32, #tpu.memory_space<vmem>>, vector<1x128xf32>
    tpu.vector_store %arg3[%c0_2, %c0_3], %121 {strides = array<i32>} : memref<1x128xf32, #tpu.memory_space<vmem>>, vector<1x128xf32>,
    return
  }
  func.func @transform_0(%arg0: i32) -> i32 {
    %c0_i32 = arith.constant 0 : i32
    %c0_i32_0 = arith.constant 0 : i32
    return %c0_i32 : i32
  }
  func.func @transform_1(%arg0: i32) -> (i32, i32) {
    %c0_i32 = arith.constant 0 : i32
    %c0_i32_0 = arith.constant 0 : i32
    return %c0_i32, %arg0 : i32, i32
  }
  func.func @transform_2(%arg0: i32) -> (i32, i32) {
    %c0_i32 = arith.constant 0 : i32
    %c0_i32_0 = arith.constant 0 : i32
    return %c0_i32, %arg0 : i32, i32
  }
}

</mosaic_0001>

<llo_original>
// kernel: tpu_custom_call.1
$region0: #{tpu_custom_call.1}
  #allocation0 [shape = 'u32[]', space=smem, size = 0x4, offset = 0x4, fixed_abs, tag = 'smem constant byte address 0x4 - core index']
  #allocation1 [shape = 'u32[144,128]{1,0:T(1,128)}', space=vmem, size = 0x12000, scoped, tag = 'internal scratch']
  %s0 = inlined_call_operand.hbm [shape: f32[32], index: 0, kind: input, shape index: {}]
  %s1 = inlined_call_operand.hbm [shape: f32[9,128], index: 1, kind: input, shape index: {}]
  %s2 = inlined_call_operand.hbm [shape: f32[1,128], index: 2, kind: output, shape index: {}]
  %s3 = sld [smem:[#allocation0]]
  $region26: #{tpu_custom_call.1} parent=0
    _
  %s5 = ssub.s32 1, %s3
  %s6 = scalar_select 0, %s5, %s3
  $region1: #{tpu_custom_call.1} parent=0
    #allocation2 [shape = 'u8[512]{0}', space=smem, size = 0x200, scoped, tag = 'input window, operand 0, single buffered']
    #allocation3 [shape = 's32[1]{0}', space=sflag, size = 0x4, scoped, tag = 'scoped memory for tpu_custom_call.1']
    #allocation4 [shape = 's32[1]{0}', space=sflag, size = 0x4, scoped, tag = 'scoped memory for tpu_custom_call.1']
    #allocation5 [shape = 's32[1]{0}', space=sflag, size = 0x4, scoped, tag = 'scoped memory for tpu_custom_call.1']
    #allocation6 [shape = 'u8[8192]{0}', space=vmem, size = 0x2000, scoped, tag = 'input window, operand 1, single buffered']
    #allocation7 [shape = 'u8[512]{0}', space=vmem, size = 0x400, scoped, tag = 'output window, operand 0, single buffered']
    %7 = vsyncpa [#allocation5], 0
    %8 = vsyncpa [#allocation3], 0
    %9 = vsyncpa [#allocation4], 0
    // Predicated region
    $region2: #{tpu_custom_call.1} parent=1 // pred_check
      _
    $region3: #{tpu_custom_call.1} parent=1 // pred_check_branch
      %11 = sbr.rel (0) target = $region5
    $region4: #{tpu_custom_call.1} parent=1 // pred_region
      %s13 = ssub.s32 16, 16
      %14 = vsyncadd [#allocation5], %s13
      %17 = dma.hbm_to_smem %s0, 16, [#allocation2], [#allocation5]
    $region5: #{tpu_custom_call.1} parent=1 // pred_fallthru
      _
    // Predicated region
    $region6: #{tpu_custom_call.1} parent=1 // pred_check
      _
    $region7: #{tpu_custom_call.1} parent=1 // pred_check_branch
      %19 = sbr.rel (0) target = $region9
    $region8: #{tpu_custom_call.1} parent=1 // pred_region
      %s21 = ssub.s32 256, 256
      %22 = vsyncadd [#allocation3], %s21
      %s23 = sshll.u32 [#allocation6], 4
      %s24 = int_to_ptr.vmem [resolvable:$true] %s23
      %29 = dma.hbm_to_vmem [thread:$0]  %s1, 256, %s24, [#allocation3], 128, 128, 8
    $region9: #{tpu_custom_call.1} parent=1 // pred_fallthru
      _
    // Predicated region
    $region10: #{tpu_custom_call.1} parent=1 // pred_check
      _
    $region11: #{tpu_custom_call.1} parent=1 // pred_check_branch
      %31 = sbr.rel (0) target = $region13
    $region12: #{tpu_custom_call.1} parent=1 // pred_region
      %32 = dma.done [#allocation5], 16
    $region13: #{tpu_custom_call.1} parent=1 // pred_fallthru
      _
    // Predicated region
    $region14: #{tpu_custom_call.1} parent=1 // pred_check
      _
    $region15: #{tpu_custom_call.1} parent=1 // pred_check_branch
      %34 = sbr.rel (0) target = $region17
    $region16: #{tpu_custom_call.1} parent=1 // pred_region
      %35 = dma.done [#allocation3], 256
    $region17: #{tpu_custom_call.1} parent=1 // pred_fallthru
      _
    %36 = sfence
    %v37 = vld [vmem:[#allocation6] sm:$0xff]
    %v38 = vld [vmem:[#allocation6 + $0x8] sm:$0x1]
    %s39 = sld [smem:[#allocation2]]
    %v40 = vstv %s39
    %v41 = vmul.f32 %v37, %v40
    %s42 = sld [smem:[#allocation2 + $0x1]]
    %v43 = vstv %s42
    %v44 = vmul.f32 %v37, %v43
    %s45 = sld [smem:[#allocation2 + $0x2]]
    %v46 = vstv %s45
    %v47 = vmul.f32 %v37, %v46
    %v49 = vrot.slane %v47, 1
    %v51 = vadd.f32 %v41, %v49
    %s52 = sld [smem:[#allocation2 + $0x3]]
    %v53 = vstv %s52
    %v54 = vmul.f32 %v37, %v53
    %v56 = vrot.slane %v54, 1
    %v58 = vadd.f32 %v44, %v56
    %s59 = sld [smem:[#allocation2 + $0x4]]
    %v60 = vstv %s59
    %v61 = vmul.f32 %v37, %v60
    %v63 = vrot.slane %v61, 2
    %v65 = vadd.f32 %v51, %v63
    %s66 = sld [smem:[#allocation2 + $0x5]]
    %v67 = vstv %s66
    %v68 = vmul.f32 %v37, %v67
    %v70 = vrot.slane %v68, 2
    %v72 = vadd.f32 %v58, %v70
    %s73 = sld [smem:[#allocation2 + $0x6]]
    %v74 = vstv %s73
    %v75 = vmul.f32 %v37, %v74
    %v77 = vrot.slane %v75, 3
    %v79 = vadd.f32 %v65, %v77
    %s80 = sld [smem:[#allocation2 + $0x7]]
    %v81 = vstv %s80
    %v82 = vmul.f32 %v37, %v81
    %v84 = vrot.slane %v82, 3
    %v86 = vadd.f32 %v72, %v84
    %s87 = sld [smem:[#allocation2 + $0x8]]
    %v88 = vstv %s87
    %v89 = vmul.f32 %v37, %v88
    %v91 = vrot.slane %v89, 4
    %v93 = vadd.f32 %v79, %v91
    %s94 = sld [smem:[#allocation2 + $0x9]]
    %v95 = vstv %s94
    %v96 = vmul.f32 %v37, %v95
    %v98 = vrot.slane %v96, 4
    %v100 = vadd.f32 %v86, %v98
    %s101 = sld [smem:[#allocation2 + $0xa]]
    %v102 = vstv %s101
    %v103 = vmul.f32 %v37, %v102
    %v105 = vrot.slane %v103, 5
    %v107 = vadd.f32 %v93, %v105
    %s108 = sld [smem:[#allocation2 + $0xb]]
    %v109 = vstv %s108
    %v110 = vmul.f32 %v37, %v109
    %v112 = vrot.slane %v110, 5
    %v114 = vadd.f32 %v100, %v112
    %s115 = sld [smem:[#allocation2 + $0xc]]
    %v116 = vstv %s115
    %v117 = vmul.f32 %v37, %v116
    %v119 = vrot.slane %v117, 6
    %v121 = vadd.f32 %v107, %v119
    %s122 = sld [smem:[#allocation2 + $0xd]]
    %v123 = vstv %s122
    %v124 = vmul.f32 %v37, %v123
    %v126 = vrot.slane %v124, 6
    %v128 = vadd.f32 %v114, %v126
    %s129 = sld [smem:[#allocation2 + $0xe]]
    %v130 = vstv %s129
    %v131 = vmul.f32 %v37, %v130
    %v133 = vrot.slane %v131, 7
    %v135 = vadd.f32 %v121, %v133
    %s136 = sld [smem:[#allocation2 + $0xf]]
    %v137 = vstv %s136
    %v138 = vmul.f32 %v37, %v137
    %v140 = vrot.slane %v138, 7
    %v142 = vadd.f32 %v128, %v140
    %s143 = sld [smem:[#allocation2 + $0x10]]
    %v144 = vstv %s143
    %v145 = vmul.f32 %v38, %v144
    %v146 = vadd.f32 %v135, %v145
    %s147 = sld [smem:[#allocation2 + $0x11]]
    %v148 = vstv %s147
    %v149 = vmul.f32 %v38, %v148
    %v150 = vadd.f32 %v142, %v149
    %s151 = sld [smem:[#allocation2 + $0x12]]
    %v152 = vstv %s151
    %v153 = vadd.f32 %v146, %v152
    %v154 = vtanh.pop %v153
    %s155 = sld [smem:[#allocation2 + $0x13]]
    %v156 = vstv %s155
    %v157 = vadd.f32 %v150, %v156
    %v158 = vtanh.pop %v157
    %s159 = sld [smem:[#allocation2 + $0x14]]
    %v160 = vstv %s159
    %v161 = vmul.f32 %v154, %v160
    %s162 = sld [smem:[#allocation2 + $0x15]]
    %v163 = vstv %s162
    %v164 = vmul.f32 %v158, %v163
    %v165 = vadd.f32 %v161, %v164
    %s166 = sld [smem:[#allocation2 + $0x16]]
    %v167 = vstv %s166
    %v168 = vadd.f32 %v165, %v167
    %s169 = sld [smem:[#allocation2 + $0x17]]
    %v170 = vstv %s169
    %v171 = vmul.f32 %v154, %v170
    %s172 = sld [smem:[#allocation2 + $0x18]]
    %v173 = vstv %s172
    %v174 = vmul.f32 %v158, %v173
    %v175 = vadd.f32 %v171, %v174
    %s176 = sld [smem:[#allocation2 + $0x19]]
    %v177 = vstv %s176
    %v178 = vadd.f32 %v175, %v177
    %v179 = vmul.f32 %v154, %v154
    %s180 = sld [smem:[#allocation2 + $0x1a]]
    %v181 = vstv %s180
    %v182 = vmul.f32 %v179, %v181
    %v183 = vmul.f32 %v158, %v158
    %s184 = sld [smem:[#allocation2 + $0x1b]]
    %v185 = vstv %s184
    %v186 = vmul.f32 %v183, %v185
    %v187 = vadd.f32 %v182, %v186
    %s188 = sld [smem:[#allocation2 + $0x1c]]
    %v189 = vstv %s188
    %v190 = vadd.f32 %v187, %v189
    %v191 = vmul.f32 %v168, %v178
    %v192 = vadd.f32 %v191, %v190
    %193 = vst [vmem:[#allocation7] sm:$0x1] %v192
    // Predicated region
    $region18: #{tpu_custom_call.1} parent=1 // pred_check
      _
    $region19: #{tpu_custom_call.1} parent=1 // pred_check_branch
      %195 = sbr.rel (0) target = $region21
    $region20: #{tpu_custom_call.1} parent=1 // pred_region
      %s197 = ssub.s32 16, 16
      %198 = vsyncadd [#allocation4], %s197
      %s200 = sshll.u32 [#allocation7], 4
      %s201 = int_to_ptr.vmem [resolvable:$true] %s200
      %203 = dma.vmem_to_hbm [thread:$0]  %s201, 16, %s2, [#allocation4]
    $region21: #{tpu_custom_call.1} parent=1 // pred_fallthru
      _
    // Predicated region
    $region22: #{tpu_custom_call.1} parent=1 // pred_check
      _
    $region23: #{tpu_custom_call.1} parent=1 // pred_check_branch
      %205 = sbr.rel (0) target = $region25
    $region24: #{tpu_custom_call.1} parent=1 // pred_region
      %206 = dma.done [#allocation4], 16
    $region25: #{tpu_custom_call.1} parent=1 // pred_fallthru
      _
    %207 = vsyncpa [#allocation3], 1
    %208 = vsyncpa [#allocation4], 1
    %209 = vsyncpa [#allocation5], 1

</llo_original>
